<compile_context>
chip_gen: v5e
topology: v5e:2x2
jax: 0.10.0
libtpu: 0.0.40
codegen_flags: <defaults>
</compile_context>

<pallas_src>
import functools

import jax
import jax.numpy as jnp
from jax import lax
from jax.experimental import pallas as pl
from jax.experimental.pallas import tpu as pltpu


_PACKED_TILE_ROWS = 4096      # packed 128-lane rows per block (64K samples @ C=8)
_ROWWISE_TILE = 4096          # samples per block in the row-wise fallback
_VMEM_LIMIT = 48 * 1024 * 1024


def _cdiv(a, b):
    return -(-a // b)


def _compiler_params(dim_sem):
    return pltpu.CompilerParams(dimension_semantics=dim_sem,
                                vmem_limit_bytes=_VMEM_LIMIT)


def _num_tensorcores():
    """Best-effort TensorCore count; defaults to 1 (correct for v5e/v6e)."""
    try:
        info = pltpu.get_tpu_info()
    except Exception:
        return 1
    for attr in ("num_cores", "core_count", "num_tensorcores",
                 "tensorcores_per_chip", "cores_per_chip"):
        v = getattr(info, attr, None)
        if isinstance(v, int) and 1 <= v <= 16:
            return v
    return 1


def _choose_partials(num_tiles):
    cores = _num_tensorcores()
    if cores > 1 and num_tiles >= cores and num_tiles % cores == 0:
        return cores
    return 1


def _pow_modulator(one_minus_pt, gamma):
    """(1 - p_t) ** gamma; repeated multiplies for small integer gamma."""
    g = float(gamma)
    if g == int(g) and 0 <= int(g) <= 8:
        out = jnp.ones_like(one_minus_pt)
        for _ in range(int(g)):
            out = out * one_minus_pt
        return out
    return jnp.power(one_minus_pt, g)   # non-integer gamma: transcendental path


# ---------------------------------------------------------------------------
# Lane-dense packed path: G = 128 // C samples share one 128-lane row.
# ---------------------------------------------------------------------------

def _segmented_max_bcast(x, c):
    """x: (T, L) f32, L a multiple of the power-of-two segment width c.
    Returns (T, L) where every lane holds the max over its segment of c
    consecutive lanes.  The per-lane group ids are rolled with the same
    pltpu.roll as the values, so the validity mask is correct regardless of
    the rotation direction convention."""
    t, l = x.shape
    gid = (lax.broadcasted_iota(jnp.int32, (t, l), 1) // c).astype(jnp.float32)
    m = x
    k = 1
    while k < c:
        for s in (k, l - k):                    # both rotation directions
            mv = pltpu.roll(m, shift=s, axis=1)
            gv = pltpu.roll(gid, shift=s, axis=1)
            m = jnp.maximum(m, jnp.where(gv == gid, mv, -jnp.inf))
        k *= 2
    return m


def _seg_selector(l, g, c, transpose=False):
    """Constant 0/1 selector: entry is 1 iff lane l belongs to sample g."""
    if not transpose:                           # (L, G): segmented sum
        a = lax.broadcasted_iota(jnp.int32, (l, g), 0) // c
        b = lax.broadcasted_iota(jnp.int32, (l, g), 1)
    else:                                       # (G, L): broadcast back
        a = lax.broadcasted_iota(jnp.int32, (g, l), 0)
        b = lax.broadcasted_iota(jnp.int32, (g, l), 1) // c
    return (a == b).astype(jnp.float32)


def _packed_per_sample_focal(x_f32, tgt_i32, *, c, alpha, gamma):
    """x: (T, L = G*c) packed logits (f32); tgt: (T, G) int32 -> (T, G)."""
    t, l = x_f32.shape
    g = l // c

    m_b = _segmented_max_bcast(x_f32, c)                       # (T, L)
    shifted = x_f32 - m_b
    e = jnp.exp(shifted)                                       # dense EUP

    sel = _seg_selector(l, g, c)                               # (L, G)
    sumexp = jnp.dot(e, sel, preferred_element_type=jnp.float32)      # (T, G)

    # Broadcast the integer targets over each sample's c lanes (MXU), then
    # gather the (max-shifted) target logit with a one-hot mask.
    sel_t = _seg_selector(l, g, c, transpose=True)             # (G, L)
    tgt_b = jnp.dot(tgt_i32.astype(jnp.float32), sel_t,
                    preferred_element_type=jnp.float32)        # (T, L)
    lane_in_grp = (lax.broadcasted_iota(jnp.int32, (t, l), 1) % c
                   ).astype(jnp.float32)
    onehot = lane_in_grp == tgt_b
    tgt_shifted = jnp.dot(jnp.where(onehot, shifted, 0.0), sel,
                          preferred_element_type=jnp.float32)  # (T, G)

    ce = jnp.log(sumexp) - tgt_shifted                         # (T, G)
    p_t = jnp.exp(-ce)                                         # exp(-ce), per review
    return alpha * _pow_modulator(1.0 - p_t, gamma) * ce


def _packed_reduce_kernel(logits_ref, targets_ref, out_ref, *, c, alpha, gamma,
                          rows_valid, tile_rows, tiles_per_partial):
    @pl.when(pl.program_id(1) == 0)
    def _():
        out_ref[...] = jnp.zeros_like(out_ref)

    x = logits_ref[...].astype(jnp.float32)         # bf16 DMA, f32 compute
    focal = _packed_per_sample_focal(x, targets_ref[...], c=c,
                                     alpha=alpha, gamma=gamma)

    # Mask packed rows belonging to the partial trailing block (no wrapper pad).
    row0 = (pl.program_id(0) * tiles_per_partial + pl.program_id(1)) * tile_rows
    rows = row0 + lax.broadcasted_iota(jnp.int32, (focal.shape[0], 1), 0)
    focal = jnp.where(rows < rows_valid, focal, 0.0)

    out_ref[...] += jnp.sum(focal, axis=(0, 1), keepdims=True).reshape(1, 1, 1)


def _packed_per_sample_kernel(logits_ref, targets_ref, out_ref, *, c, alpha, gamma):
    x = logits_ref[...].astype(jnp.float32)
    out_ref[...] = _packed_per_sample_focal(x, targets_ref[...], c=c,
                                            alpha=alpha, gamma=gamma)


# ---------------------------------------------------------------------------
# Row-wise fallback (one sample per row; used when 128 % C != 0 or N is tiny).
# ---------------------------------------------------------------------------

def _rowwise_focal(logits_f32, tgt_i32, *, alpha, gamma):
    t, c = logits_f32.shape
    m = jnp.max(logits_f32, axis=-1, keepdims=True)
    shifted = logits_f32 - m
    lse = jnp.log(jnp.sum(jnp.exp(shifted), axis=-1, keepdims=True)) + m
    col = lax.broadcasted_iota(jnp.int32, (t, c), 1)
    onehot = (col == tgt_i32).astype(jnp.float32)
    tgt_logit = jnp.sum(onehot * logits_f32, axis=-1, keepdims=True)
    ce = lse - tgt_logit
    p_t = jnp.exp(-ce)
    return alpha * _pow_modulator(1.0 - p_t, gamma) * ce


def _rowwise_reduce_kernel(logits_ref, targets_ref, out_ref, *, alpha, gamma,
                           n_valid, tile_n, tiles_per_partial):
    @pl.when(pl.program_id(1) == 0)
    def _():
        out_ref[...] = jnp.zeros_like(out_ref)

    focal = _rowwise_focal(logits_ref[...].astype(jnp.float32),
                           targets_ref[...], alpha=alpha, gamma=gamma)
    row0 = (pl.program_id(0) * tiles_per_partial + pl.program_id(1)) * tile_n
    rows = row0 + lax.broadcasted_iota(jnp.int32, (tile_n, 1), 0)
    focal = jnp.where(rows < n_valid, focal, 0.0)
    out_ref[...] += jnp.sum(focal, axis=(0, 1), keepdims=True).reshape(1, 1, 1)


def _rowwise_per_sample_kernel(logits_ref, targets_ref, out_ref, *, alpha, gamma):
    out_ref[...] = _rowwise_focal(logits_ref[...].astype(jnp.float32),
                                  targets_ref[...], alpha=alpha, gamma=gamma)


# ---------------------------------------------------------------------------
# Wrapper
# ---------------------------------------------------------------------------

def _focal_rows_jax(logits, targets, alpha, gamma):
    # Plain-JAX per-row focal loss; used for the (< 16 row) ragged tail of the
    # packed path and as the reference implementation.
    x = logits.astype(jnp.float32)
    lse = jax.nn.logsumexp(x, axis=-1)
    tl = jnp.take_along_axis(x, targets.astype(jnp.int32)[:, None], axis=-1)[:, 0]
    ce = lse - tl
    p_t = jnp.exp(-ce)
    return alpha * (1.0 - p_t) ** gamma * ce


def focal_loss(logits, targets, *, alpha=1.0, gamma=2.0, reduction="mean"):
    """Pallas TPU focal loss.  logits: (N, C) f32/bf16, targets: (N,) ints.
    reduction: 'mean' | 'sum' | 'none'.  alpha is a scalar (no per-class
    alpha_t weighting, matching the reference module)."""
    if reduction not in ("mean", "sum", "none"):
        raise ValueError(f"unsupported reduction: {reduction!r}")
    n, c = logits.shape
    targets = targets.astype(jnp.int32)
    alpha = float(alpha)
    gamma = float(gamma)

    g = 128 // c if (c >= 1 and 128 % c == 0) else 0
    use_packed = g > 1 and (n // g) >= 8

    if use_packed:
        r = n // g
        n_main = r * g
        if n_main == n:          # pure reshape, no data movement needed
            logits_pk = logits.reshape(r, g * c)
            targets_pk = targets.reshape(r, g)
        else:                    # ragged tail handled outside the kernel
            logits_pk = logits[:n_main].reshape(r, g * c)
            targets_pk = targets[:n_main].reshape(r, g)
        tn_r = r if r <= _PACKED_TILE_ROWS else _PACKED_TILE_ROWS
        num_tiles = _cdiv(r, tn_r)

        if reduction == "none":
            kern = functools.partial(_packed_per_sample_kernel, c=c,
                                     alpha=alpha, gamma=gamma)
            out = pl.pallas_call(
                kern,
                out_shape=jax.ShapeDtypeStruct((r, g), jnp.float32),
                grid_spec=pltpu.PrefetchScalarGridSpec(
                    num_scalar_prefetch=0,
                    grid=(num_tiles,),
                    in_specs=[pl.BlockSpec((tn_r, g * c), lambda i: (i, 0)),
                              pl.BlockSpec((tn_r, g), lambda i: (i, 0))],
                    out_specs=pl.BlockSpec((tn_r, g), lambda i: (i, 0))),
                compiler_params=_compiler_params(("parallel",)),
            )(logits_pk, targets_pk)
            main = out.reshape(n_main)
            if n_main == n:
                return main
            tail = _focal_rows_jax(logits[n_main:], targets[n_main:], alpha, gamma)
            return jnp.concatenate([main, tail])

        p = _choose_partials(num_tiles)
        tpp = num_tiles // p
        kern = functools.partial(_packed_reduce_kernel, c=c, alpha=alpha,
                                 gamma=gamma, rows_valid=r, tile_rows=tn_r,
                                 tiles_per_partial=tpp)
        partials = pl.pallas_call(
            kern,
            out_shape=jax.ShapeDtypeStruct((p, 1, 1), jnp.float32),
            grid_spec=pltpu.PrefetchScalarGridSpec(
                num_scalar_prefetch=0,
                grid=(p, tpp),
                in_specs=[pl.BlockSpec((tn_r, g * c),
                                       lambda i, j: (i * tpp + j, 0)),
                          pl.BlockSpec((tn_r, g),
                                       lambda i, j: (i * tpp + j, 0))],
                out_specs=pl.BlockSpec((1, 1, 1), lambda i, j: (i, 0, 0))),
            compiler_params=_compiler_params(("parallel", "arbitrary")),
        )(logits_pk, targets_pk)
        total = jnp.sum(partials)
        if n_main != n:
            total = total + jnp.sum(
                _focal_rows_jax(logits[n_main:], targets[n_main:], alpha, gamma))
        return total / jnp.float32(n) if reduction == "mean" else total

    # ---- row-wise fallback ------------------------------------------------
    targets_col = targets.reshape(n, 1)
    tn = n if n <= _ROWWISE_TILE else _ROWWISE_TILE
    num_tiles = _cdiv(n, tn)

    if reduction == "none":
        kern = functools.partial(_rowwise_per_sample_kernel,
                                 alpha=alpha, gamma=gamma)
        out = pl.pallas_call(
            kern,
            out_shape=jax.ShapeDtypeStruct((n, 1), jnp.float32),
            grid_spec=pltpu.PrefetchScalarGridSpec(
                num_scalar_prefetch=0,
                grid=(num_tiles,),
                in_specs=[pl.BlockSpec((tn, c), lambda i: (i, 0)),
                          pl.BlockSpec((tn, 1), lambda i: (i, 0))],
                out_specs=pl.BlockSpec((tn, 1), lambda i: (i, 0))),
            compiler_params=_compiler_params(("parallel",)),
        )(logits, targets_col)
        return out[:, 0]

    p = _choose_partials(num_tiles)
    tpp = num_tiles // p
    kern = functools.partial(_rowwise_reduce_kernel, alpha=alpha, gamma=gamma,
                             n_valid=n, tile_n=tn, tiles_per_partial=tpp)
    partials = pl.pallas_call(
        kern,
        out_shape=jax.ShapeDtypeStruct((p, 1, 1), jnp.float32),
        grid_spec=pltpu.PrefetchScalarGridSpec(
            num_scalar_prefetch=0,
            grid=(p, tpp),
            in_specs=[pl.BlockSpec((tn, c), lambda i, j: (i * tpp + j, 0)),
                      pl.BlockSpec((tn, 1), lambda i, j: (i * tpp + j, 0))],
            out_specs=pl.BlockSpec((1, 1, 1), lambda i, j: (i, 0, 0))),
        compiler_params=_compiler_params(("parallel", "arbitrary")),
    )(logits, targets_col)
    total = jnp.sum(partials)
    return total / jnp.float32(n) if reduction == "mean" else total


def _focal_loss_ref(logits, targets, alpha=1.0, gamma=2.0, reduction="mean"):
    fl = _focal_rows_jax(logits, targets, float(alpha), float(gamma))
    if reduction == "mean":
        return jnp.mean(fl)
    if reduction == "sum":
        return jnp.sum(fl)
    return fl


if __name__ == "__main__":
    key = jax.random.PRNGKey(0)
    k1, k2, k3, k4, k5, k6 = jax.random.split(key, 6)

    # 1) Module-scale case (16 samples, 8 classes): row-wise fallback, all
    #    three reductions.
    N, C = 16, 8
    logits = jax.random.normal(k1, (N, C), dtype=jnp.float32)
    targets = jax.random.randint(k2, (N,), 0, C, dtype=jnp.int32)
    for red in ("mean", "sum", "none"):
        got = jax.block_until_ready(focal_loss(logits, targets, reduction=red))
        want = _focal_loss_ref(logits, targets, reduction=red)
        assert jnp.allclose(got, want, rtol=1e-4, atol=1e-5), (red, got, want)
    assert focal_loss(logits, targets, reduction="none").shape == (N,)

    # 2) Lane-dense packed path, exact multiple of 16 samples: mean + none.
    N2 = 1024
    logits2 = jax.random.normal(k3, (N2, C), dtype=jnp.float32)
    targets2 = jax.random.randint(k4, (N2,), 0, C, dtype=jnp.int32)
    got = jax.block_until_ready(focal_loss(logits2, targets2, reduction="mean"))
    want = _focal_loss_ref(logits2, targets2, reduction="mean")
    assert jnp.allclose(got, want, rtol=1e-4, atol=1e-5), (got, want)
    got_n = jax.block_until_ready(focal_loss(logits2, targets2, reduction="none"))
    want_n = _focal_loss_ref(logits2, targets2, reduction="none")
    assert got_n.shape == (N2,)
    assert jnp.allclose(got_n, want_n, rtol=1e-4, atol=1e-5)

    # 3) Packed path with a ragged tail (1000 % 16 == 8) and bf16 logits.
    N3 = 1000
    logits3 = jax.random.normal(k5, (N3, C), dtype=jnp.float32).astype(jnp.bfloat16)
    targets3 = jax.random.randint(k6, (N3,), 0, C, dtype=jnp.int32)
    got = jax.block_until_ready(focal_loss(logits3, targets3, reduction="mean"))
    want = _focal_loss_ref(logits3.astype(jnp.float32), targets3, reduction="mean")
    assert jnp.allclose(got, want, rtol=1e-4, atol=1e-4), (got, want)

    # 4) Row-wise fallback for a class count that does not divide 128.
    N4, C4 = 300, 10
    logits4 = jax.random.normal(k1, (N4, C4), dtype=jnp.float32)
    targets4 = jax.random.randint(k2, (N4,), 0, C4, dtype=jnp.int32)
    got = jax.block_until_ready(focal_loss(logits4, targets4, reduction="mean"))
    want = _focal_loss_ref(logits4, targets4, reduction="mean")
    assert jnp.allclose(got, want, rtol=1e-4, atol=1e-5), (got, want)

    print("KERNEL_OK")
</pallas_src>

<mosaic_0001>
module attributes {stable_mosaic.version = 11 : i64} {
  func.func @_rowwise_reduce_kernel(%arg0: i32, %arg1: i32, %arg2: memref<16x8xf32, #tpu.memory_space<vmem>>, %arg3: memref<16x1xi32, #tpu.memory_space<vmem>>, %arg4: memref<1x1x1xf32, #tpu.memory_space<vmem>>) attributes {dimension_semantics = [#tpu.dimension_semantics<parallel>, #tpu.dimension_semantics<arbitrary>], iteration_bounds = array<i64: 1, 1>, scalar_prefetch = 0 : i64, scratch_operands = 0 : i64, tpu.core_type = #tpu.core_type<tc>, window_params = [{transform_indices = @transform_0, window_bounds = array<i64: 16, 8>}, {transform_indices = @transform_1, window_bounds = array<i64: 16, 1>}, {transform_indices = @transform_2, window_bounds = array<i64: 1, 1, 1>}]} {
    %c0_i32 = arith.constant 0 : i32
    %0 = arith.cmpi eq, %arg1, %c0_i32 : i32
    %1 = arith.extui %0 : i1 to i32
    %c0_i32_0 = arith.constant 0 : i32
    %2 = arith.cmpi ne, %1, %c0_i32_0 : i32
    scf.if %2 {
      %cst_19 = arith.constant 0.000000e+00 : f32
      %53 = vector.broadcast %cst_19 : f32 to vector<1x1x1xf32>
      %c0_20 = arith.constant 0 : index
      %c0_21 = arith.constant 0 : index
      %c0_22 = arith.constant 0 : index
      %54 = vector.load %arg4[%c0_20, %c0_21, %c0_22] : memref<1x1x1xf32, #tpu.memory_space<vmem>>, vector<1x1x1xf32>
      tpu.vector_store %arg4[%c0_20, %c0_21, %c0_22], %53 {strides = array<i32>} : memref<1x1x1xf32, #tpu.memory_space<vmem>>, vector<1x1x1xf32>,
    } else {
    }
    %c0 = arith.constant 0 : index
    %c0_1 = arith.constant 0 : index
    %3 = vector.load %arg2[%c0, %c0_1] : memref<16x8xf32, #tpu.memory_space<vmem>>, vector<16x8xf32>
    %c0_2 = arith.constant 0 : index
    %c0_3 = arith.constant 0 : index
    %4 = vector.load %arg3[%c0_2, %c0_3] : memref<16x1xi32, #tpu.memory_space<vmem>>, vector<16x1xi32>
    %cst = arith.constant dense<0xFF800000> : vector<16xf32>
    %5 = vector.multi_reduction <maximumf>, %3, %cst [1] : vector<16x8xf32> to vector<16xf32>
    %6 = vector.shape_cast %5 : vector<16xf32> to vector<16x1xf32>
    %7 = vector.broadcast %6 : vector<16x1xf32> to vector<16x8xf32>
    %8 = arith.subf %3, %7 : vector<16x8xf32>
    %9 = math.exp %8 : vector<16x8xf32>
    %cst_4 = arith.constant dense<0.000000e+00> : vector<16xf32>
    %10 = vector.multi_reduction <add>, %9, %cst_4 [1] : vector<16x8xf32> to vector<16xf32>
    %11 = vector.shape_cast %10 : vector<16xf32> to vector<16x1xf32>
    %12 = math.log %11 : vector<16x1xf32>
    %13 = arith.addf %12, %6 : vector<16x1xf32>
    %14 = tpu.iota {dimensions = array<i32: 1>} : vector<16x8xi32>
    %15 = vector.broadcast %4 : vector<16x1xi32> to vector<16x8xi32>
    %16 = arith.cmpi eq, %14, %15 : vector<16x8xi32>
    %17 = arith.extui %16 : vector<16x8xi1> to vector<16x8xi32>
    %18 = arith.sitofp %17 : vector<16x8xi32> to vector<16x8xf32>
    %19 = arith.mulf %18, %3 : vector<16x8xf32>
    %cst_5 = arith.constant dense<0.000000e+00> : vector<16xf32>
    %20 = vector.multi_reduction <add>, %19, %cst_5 [1] : vector<16x8xf32> to vector<16xf32>
    %21 = vector.shape_cast %20 : vector<16xf32> to vector<16x1xf32>
    %22 = arith.subf %13, %21 : vector<16x1xf32>
    %cst_6 = arith.constant 0.000000e+00 : f32
    %23 = vector.broadcast %cst_6 : f32 to vector<16x1xf32>
    %24 = arith.subf %23, %22 : vector<16x1xf32>
    %25 = math.exp %24 : vector<16x1xf32>
    %cst_7 = arith.constant 1.000000e+00 : f32
    %26 = vector.broadcast %cst_7 : f32 to vector<16x1xf32>
    %27 = arith.subf %26, %25 : vector<16x1xf32>
    %cst_8 = arith.constant 1.000000e+00 : f32
    %28 = vector.broadcast %cst_8 : f32 to vector<16x1xf32>
    %29 = arith.mulf %28, %27 : vector<16x1xf32>
    %30 = arith.mulf %29, %27 : vector<16x1xf32>
    %cst_9 = arith.constant 1.000000e+00 : f32
    %31 = vector.broadcast %cst_9 : f32 to vector<16x1xf32>
    %32 = arith.mulf %31, %30 : vector<16x1xf32>
    %33 = arith.mulf %32, %22 : vector<16x1xf32>
    %c1_i32 = arith.constant 1 : i32
    %34 = arith.muli %arg0, %c1_i32 : i32
    %35 = arith.addi %34, %arg1 : i32
    %c16_i32 = arith.constant 16 : i32
    %36 = arith.muli %35, %c16_i32 : i32
    %37 = tpu.iota {dimensions = array<i32: 0>} : vector<16x1xi32>
    %38 = vector.broadcast %36 : i32 to vector<16x1xi32>
    %39 = arith.addi %38, %37 : vector<16x1xi32>
    %c16_i32_10 = arith.constant 16 : i32
    %40 = vector.broadcast %c16_i32_10 : i32 to vector<16x1xi32>
    %41 = arith.cmpi slt, %39, %40 : vector<16x1xi32>
    %cst_11 = arith.constant 0.000000e+00 : f32
    %42 = vector.broadcast %cst_11 : f32 to vector<16x1xf32>
    %43 = arith.select %41, %33, %42 : vector<16x1xi1>, vector<16x1xf32>
    %c0_12 = arith.constant 0 : index
    %c0_13 = arith.constant 0 : index
    %c0_14 = arith.constant 0 : index
    %44 = vector.load %arg4[%c0_12, %c0_13, %c0_14] : memref<1x1x1xf32, #tpu.memory_space<vmem>>, vector<1x1x1xf32>
    %45 = vector.shape_cast %43 : vector<16x1xf32> to vector<1x16x1xf32>
    %cst_15 = arith.constant dense<0.000000e+00> : vector<1xf32>
    %46 = vector.multi_reduction <add>, %45, %cst_15 [1, 2] : vector<1x16x1xf32> to vector<1xf32>
    %47 = vector.shape_cast %46 : vector<1xf32> to vector<1x1x1xf32>
    %48 = vector.extract %47[0, 0, 0] : f32 from vector<1x1x1xf32>
    %49 = vector.broadcast %48 : f32 to vector<1x1xf32>
    %50 = vector.shape_cast %49 : vector<1x1xf32> to vector<1x1x1xf32>
    %51 = arith.addf %44, %50 : vector<1x1x1xf32>
    %c0_16 = arith.constant 0 : index
    %c0_17 = arith.constant 0 : index
    %c0_18 = arith.constant 0 : index
    %52 = vector.load %arg4[%c0_16, %c0_17, %c0_18] : memref<1x1x1xf32, #tpu.memory_space<vmem>>, vector<1x1x1xf32>
    tpu.vector_store %arg4[%c0_16, %c0_17, %c0_18], %51 {strides = array<i32>} : memref<1x1x1xf32, #tpu.memory_space<vmem>>, vector<1x1x1xf32>,
    return
  }
  func.func @transform_0(%arg0: i32, %arg1: i32) -> (i32, i32) {
    %c1_i32 = arith.constant 1 : i32
    %0 = arith.muli %arg0, %c1_i32 : i32
    %1 = arith.addi %0, %arg1 : i32
    %c0_i32 = arith.constant 0 : i32
    %c0_i32_0 = arith.constant 0 : i32
    return %1, %c0_i32 : i32, i32
  }
  func.func @transform_1(%arg0: i32, %arg1: i32) -> (i32, i32) {
    %c1_i32 = arith.constant 1 : i32
    %0 = arith.muli %arg0, %c1_i32 : i32
    %1 = arith.addi %0, %arg1 : i32
    %c0_i32 = arith.constant 0 : i32
    %c0_i32_0 = arith.constant 0 : i32
    return %1, %c0_i32 : i32, i32
  }
  func.func @transform_2(%arg0: i32, %arg1: i32) -> (i32, i32, i32) {
    %c0_i32 = arith.constant 0 : i32
    %c0_i32_0 = arith.constant 0 : i32
    %c0_i32_1 = arith.constant 0 : i32
    return %arg0, %c0_i32, %c0_i32_0 : i32, i32, i32
  }
}

</mosaic_0001>

<llo_original>
// kernel: tpu_custom_call.1
$region0: #{tpu_custom_call.1}
  #allocation0 [shape = 'u32[]', space=smem, size = 0x4, offset = 0x4, fixed_abs, tag = 'smem constant byte address 0x4 - core index']
  #allocation1 [shape = 'u32[72,128]{1,0:T(1,128)}', space=vmem, size = 0x9000, scoped, tag = 'internal scratch']
  %s0 = inlined_call_operand.vmem [shape: f32[16,8], index: 0, kind: input, shape index: {}]
  %s1 = inlined_call_operand.vmem [shape: s32[16,1], index: 1, kind: input, shape index: {}]
  %s2 = inlined_call_operand.hbm [shape: f32[1,1,1], index: 2, kind: output, shape index: {}]
  %s3 = sld [smem:[#allocation0]]
  $region22: #{tpu_custom_call.1} parent=0
    _
  %s5 = ssub.s32 1, %s3
  %s6 = scalar_select 0, %s5, %s3
  $region1: #{tpu_custom_call.1} parent=0
    #allocation2 [shape = 'u8[512]{0}', space=vmem, size = 0x400, scoped, tag = 'output window, operand 0, single buffered']
    #allocation3 [shape = 's32[1]{0}', space=sflag, size = 0x4, scoped, tag = 'scoped memory for tpu_custom_call.1']
    %7 = vsyncpa [#allocation3], 0
    // Predicated region
    $region2: #{tpu_custom_call.1} parent=1 // pred_check
      _
    $region3: #{tpu_custom_call.1} parent=1 // pred_check_branch
      %9 = sbr.rel (0) target = $region5
    $region4: #{tpu_custom_call.1} parent=1 // pred_region
      %s10 = sadd.s32 0, 0
      %s11 = smul.u32 2, %s10
      %p12 = scmp.lt.s32.totalorder %s11, 1
      %s13 = scalar_select %p12, %s11, 1
      %s14 = smul.addr %s13, 8
      %s15 = scalar_lea.vmem %s0, %s14
      %s16 = sadd.s32 0, 0
      %s17 = smul.u32 2, %s16
    $region5: #{tpu_custom_call.1} parent=1 // pred_fallthru
      _
    // Predicated region
    $region6: #{tpu_custom_call.1} parent=1 // pred_check
      _
    $region7: #{tpu_custom_call.1} parent=1 // pred_check_branch
      %19 = sbr.rel (0) target = $region9
    $region8: #{tpu_custom_call.1} parent=1 // pred_region
      %s20 = sadd.s32 0, 0
      %s21 = smul.u32 2, %s20
      %p22 = scmp.lt.s32.totalorder %s21, 1
      %s23 = scalar_select %p22, %s21, 1
      %s24 = smul.addr %s23, 8
      %s25 = scalar_lea.vmem %s1, %s24
      %s26 = sadd.s32 0, 0
      %s27 = smul.u32 2, %s26
    $region9: #{tpu_custom_call.1} parent=1 // pred_fallthru
      _
    %s28 = sadd.s32 0, 0
    %s29 = smul.u32 2, %s28
    %p30 = scmp.lt.s32.totalorder %s29, 1
    %s31 = scalar_select %p30, %s29, 1
    %s32 = smul.addr %s31, 8
    %s33 = scalar_lea.vmem %s0, %s32
    %s34 = sadd.s32 0, 0
    %s35 = smul.u32 2, %s34
    %p36 = scmp.lt.s32.totalorder %s35, 1
    %s37 = scalar_select %p36, %s35, 1
    %s38 = smul.addr %s37, 8
    %s39 = scalar_lea.vmem %s1, %s38
    %s40 = sadd.s32 0, 0
    %s41 = smul.u32 2, %s40
    %p42 = scmp.lt.s32.totalorder %s41, 1
    %s43 = scalar_select %p42, %s41, 1
    %s44 = smul.addr %s43, 8
    %s45 = scalar_lea.vmem %s0, %s44
    %s46 = sadd.s32 0, 0
    %s47 = smul.u32 2, %s46
    %s48 = sadd.s32 0, 0
    %s49 = smul.u32 2, %s48
    %p50 = scmp.lt.s32.totalorder %s49, 1
    %s51 = scalar_select %p50, %s49, 1
    %s52 = smul.addr %s51, 8
    %s53 = scalar_lea.vmem %s1, %s52
    %s54 = sadd.s32 0, 0
    %s55 = smul.u32 2, %s54
    %p56 = scmp.eq.s32.totalorder 0, 0
    // Predicated region
    $region10: #{tpu_custom_call.1} parent=1 // pred_check
      %p57 = pneg %p56
    $region11: #{tpu_custom_call.1} parent=1 // pred_check_branch
      %59 = sbr.rel (%p57) target = $region13
    $region12: #{tpu_custom_call.1} parent=1 // pred_region
      %vm60 = vcmask 0
      %61 = vst.msk [vmem:[#allocation2] sm:$0x1] %vm60, 0.0
    $region13: #{tpu_custom_call.1} parent=1 // pred_fallthru
      _
    %v62 = vld [vmem:[%s45] sm:$0xff]
    %v63 = vld [vmem:[%s45 + $0x8] sm:$0xff]
    %v64 = vld [vmem:[%s53] sm:$0xff]
    %v65 = vld [vmem:[%s53 + $0x8] sm:$0xff]
    %vm66 = vcmask 64512
    %v67 = vsel %vm66, %v62, -inf
    %68 = vmax.xlane.f32.xlu0 %v67
    %v69 = vpop.xlane.xlu0 %68
    %v70 = vsel %vm66, %v63, -inf
    %71 = vmax.xlane.f32.xlu0 %v70
    %v72 = vpop.xlane.xlu0 %71
    %v73 = vsub.f32 %v62, %v69
    %v74 = vsub.f32 %v63, %v72
    %v75 = vmul.f32 %v73, 1.442695
    %v76 = vpow.pop %v75
    %v77 = vmul.f32 %v74, 1.442695
    %v78 = vpow.pop %v77
    %v79 = vsel %vm66, %v76, 0.0
    %80 = vadd.xlane.f32.xlu0 %v79
    %v81 = vpop.xlane.xlu0 %80
    %v82 = vsel %vm66, %v78, 0.0
    %83 = vadd.xlane.f32.xlu0 %v82
    %v84 = vpop.xlane.xlu0 %83
    %v85 = vlog2.pop %v81
    %v86 = vmul.f32 %v85, 0.6931472
    %v87 = vlog2.pop %v84
    %v88 = vmul.f32 %v87, 0.6931472
    %v89 = vadd.f32 %v86, %v69
    %v90 = vadd.f32 %v88, %v72
    %v91 = vlaneseq
    %v92 = vand.u32 %v91, 127
    %93 = vset.pattern.permute.xlu0 0
    %94 = vperm.xlu0 %93, %v64
    %v95 = vpop.permute.xlu0 %94
    %96 = vset.pattern.permute.xlu0 0
    %97 = vperm.xlu0 %96, %v65
    %v98 = vpop.permute.xlu0 %97
    %vm99 = vcmp.eq.s32.totalorder %v92, %v95
    %vm100 = vcmp.eq.s32.totalorder %v92, %v98
    %v101 = vsel %vm99, 1, 0
    %v102 = vsel %vm100, 1, 0
    %v103 = vcvt.s32.f32 %v101
    %v104 = vcvt.s32.f32 %v102
    %v105 = vmul.f32 %v103, %v62
    %v106 = vmul.f32 %v104, %v63
    %v107 = vsel %vm66, %v105, 0.0
    %108 = vadd.xlane.f32.xlu0 %v107
    %v109 = vpop.xlane.xlu0 %108
    %v110 = vsel %vm66, %v106, 0.0
    %111 = vadd.xlane.f32.xlu0 %v110
    %v112 = vpop.xlane.xlu0 %111
    %v113 = vsub.f32 %v89, %v109
    %v114 = vsub.f32 %v90, %v112
    %v115 = vsub.f32 0.0, %v113
    %v116 = vsub.f32 0.0, %v114
    %v117 = vmul.f32 %v115, 1.442695
    %v118 = vpow.pop %v117
    %v119 = vmul.f32 %v116, 1.442695
    %v120 = vpow.pop %v119
    %v121 = vsub.f32 1.0, %v118
    %v122 = vsub.f32 1.0, %v120
    %v123 = vmul.f32 %v121, %v121
    %v124 = vmul.f32 %v122, %v122
    %v125 = vmul.f32 %v123, %v113
    %v126 = vmul.f32 %v124, %v114
    %s127 = sadd.s32 0, 0
    %s128 = smul.u32 %s127, 16
    %v129 = vlaneseq
    %v130 = vshrl.u32 %v129, 7
    %v131 = vadd.s32 %v130, 8
    %v132 = vstv %s128
    %v133 = vadd.s32 %v132, %v130
    %v134 = vadd.s32 %v132, %v131
    %vm135 = vcmp.lt.s32.totalorder %v133, 16
    %vm136 = vcmp.lt.s32.totalorder %v134, 16
    %v137 = vsel %vm135, %v125, 0.0
    %v138 = vsel %vm136, %v126, 0.0
    %v139 = vld [vmem:[#allocation2] sm:$0x1]
    %vm140 = vcmask 7168
    %v141 = vsel %vm140, %v137, 0.0
    %v142 = vsel %vm140, %v138, 0.0
    %v143 = vadd.f32 %v141, %v142
    %144 = vadd.xlane.f32.xlu0 %v143
    %v145 = vpop.xlane.xlu0 %144
    %v146 = vrot.slane %v145, 4
    %v147 = vadd.f32 %v145, %v146
    %v148 = vrot.slane %v147, 2
    %v149 = vadd.f32 %v147, %v148
    %v150 = vrot.slane %v149, 1
    %v151 = vadd.f32 %v149, %v150
    %s152 = vtos %v151
    %v153 = vstv %s152
    %v154 = vadd.f32 %v139, %v153
    %vm155 = vcmask 0
    %156 = vst.msk [vmem:[#allocation2] sm:$0x1] %vm155, %v154
    // Predicated region
    $region14: #{tpu_custom_call.1} parent=1 // pred_check
      _
    $region15: #{tpu_custom_call.1} parent=1 // pred_check_branch
      %158 = sbr.rel (0) target = $region17
    $region16: #{tpu_custom_call.1} parent=1 // pred_region
      %160 = vsyncadd [#allocation3], 0
      %s162 = sshll.u32 [#allocation2], 4
      %s163 = int_to_ptr.vmem [resolvable:$true] %s162
      %s164 = sshll.u32 %s2, 4
      %s165 = int_to_ptr.hbm [resolvable:$true] %s164
      %167 = dma.vmem_to_hbm [thread:$0]  %s163, 16, %s165, [#allocation3]
    $region17: #{tpu_custom_call.1} parent=1 // pred_fallthru
      _
    // Predicated region
    $region18: #{tpu_custom_call.1} parent=1 // pred_check
      _
    $region19: #{tpu_custom_call.1} parent=1 // pred_check_branch
      %169 = sbr.rel (0) target = $region21
    $region20: #{tpu_custom_call.1} parent=1 // pred_region
      %171 = dma.done [#allocation3], 16
    $region21: #{tpu_custom_call.1} parent=1 // pred_fallthru
      _
    %172 = vsyncpa [#allocation3], 1

</llo_original>
